<compile_context>
chip_gen: v7x
topology: tpu7x:2x2x1
jax: 0.10.0
libtpu: 0.0.40
codegen_flags: <defaults>
</compile_context>

<pallas_src>
import functools

import jax
import jax.numpy as jnp
from jax import lax
from jax.experimental import pallas as pl
from jax.experimental.pallas import tpu as pltpu


# ---------------- Fused all-heads attention kernel (one graph per grid step) ----
def attention_kernel(inv_ref, x_ref, w_ref, out_ref, *, att_times, att_weight):
    """All attention heads for one graph ('dot' style).

    inv_ref: (B,) f32 in SMEM — per-graph 1/N (N = true node count, pre-padding)
    x_ref:   (N_pad, D) node embeddings (zero-padded rows beyond the true N)
    w_ref:   (H, D, D) all heads' W_i (resident across all grid steps)
    out_ref: (H, D)    per-head pooled graph embedding
    """
    inv_n = inv_ref[pl.program_id(0)]                     # scalar f32 from SMEM
    x = x_ref[...]                                        # (N, D), VMEM resident
    w = w_ref[...]                                        # (H, D, D)
    N, D = x.shape
    H = w.shape[0]

    # Per-head state. Zero-padded rows stay exactly zero through every update
    # (x_pad = 0 -> x_pad*att = 0), so padding never affects sums/outputs.
    xh = jnp.broadcast_to(x[None, :, :], (H, N, D))       # (H, N, D)
    # Running column-sum of xh; seeds the first mean, then equals out of the
    # previous iteration (mean(x*att, 0) == (att.T @ x)/N == out/N).
    out_sum = jnp.broadcast_to(
        jnp.sum(x, axis=0, keepdims=True)[None, :, :], (H, 1, D))  # (H, 1, D)

    # att_times is a small static int -> unrolled Python loop.
    for _ in range(att_times):
        temp = out_sum * inv_n                            # (H, 1, D) == mean(xh, 1)
        if att_weight:
            # Batched (1, D) @ (D, D) per head on the MXU, f32 accumulate.
            h_avg = jnp.tanh(
                lax.dot_general(temp, w, (((2,), (1,)), ((0,), (0,))),
                                preferred_element_type=jnp.float32))  # (H, 1, D)
        else:
            h_avg = temp
        # 'dot' att style: sigmoid(x @ eye @ h_avg.T) == sigmoid(x @ h_avg.T).
        # VPU multiply + lane reduce (avoids a 1-column MXU result).
        att = jax.nn.sigmoid(
            jnp.sum(xh * h_avg, axis=2, keepdims=True))   # (H, N, 1), EUP sigmoid
        # x_new = x * att ; out = att.T @ x == column-sum of x_new.
        xh = xh * att                                     # (H, N, D)
        out_sum = jnp.sum(xh, axis=1, keepdims=True)      # (H, 1, D)

    out_ref[...] = out_sum[:, 0, :]                       # (H, D)


# ---------------- Wrapper: one pallas_call for all graphs -----------------------
def _attention_pallas(x_pad, inv_n, w_stack, *, att_times, att_weight):
    B, N, D = x_pad.shape
    H = w_stack.shape[0]

    kern = functools.partial(
        attention_kernel, att_times=att_times, att_weight=att_weight)

    out = pl.pallas_call(
        kern,
        grid=(B,),
        in_specs=[
            # Per-graph 1/N scalars, whole array in SMEM (indexed by program_id).
            pl.BlockSpec(memory_space=pltpu.MemorySpace.SMEM),
            # One graph's node matrix per grid step.
            pl.BlockSpec((None, N, D), lambda b: (b, 0, 0)),
            # All heads' W, same block every step -> stays VMEM-resident.
            pl.BlockSpec((H, D, D), lambda b: (0, 0, 0)),
        ],
        out_specs=pl.BlockSpec((None, H, D), lambda b: (b, 0, 0)),
        out_shape=jax.ShapeDtypeStruct((B, H, D), jnp.float32),
        compiler_params=pltpu.CompilerParams(
            dimension_semantics=("parallel",)),        # graphs across v7x cores
    )(inv_n, x_pad, w_stack)

    # torch.cat(outputs, 1): head h occupies columns [h*D, (h+1)*D)
    # -> free row-major reshape per graph.
    return out.reshape(B, 1, H * D)


def attention_module_forward(inputs, w_stack, *, att_times=1, att_weight=True,
                             att_style="dot"):
    """Mirrors Attention.forward: accepts a single (N, D) matrix or a list.

    All graphs (list path) are zero-padded to a common N and processed in a
    single pallas_call with a grid over the graph axis.
    """
    assert att_style == "dot", "only 'dot' att_style is lowered to Pallas"
    assert att_times >= 1
    is_list = isinstance(inputs, (list, tuple))
    xs = list(inputs) if is_list else [inputs]

    D = xs[0].shape[1]
    n_nodes = [int(x.shape[0]) for x in xs]
    # Pad the node axis to a multiple of 8 sublanes (zero rows are harmless:
    # they contribute 0 to every sum and stay 0 under x*att).
    n_max = max(n_nodes)
    n_pad = -(-n_max // 8) * 8

    x_pad = jnp.stack([
        jnp.pad(jnp.asarray(x, jnp.float32), ((0, n_pad - x.shape[0]), (0, 0)))
        for x in xs
    ])                                                    # (B, n_pad, D)
    inv_n = jnp.asarray([1.0 / n for n in n_nodes], jnp.float32)  # (B,)

    out = _attention_pallas(
        x_pad, inv_n, jnp.asarray(w_stack, jnp.float32),
        att_times=att_times, att_weight=att_weight)       # (B, 1, H*D)

    if is_list:
        return [out[b] for b in range(len(xs))]
    return out[0]


# ---------------- Pure-JAX reference (for correctness check) --------------------
def ref_forward(x, w_stack, att_times, att_weight):
    outs = []
    for i in range(w_stack.shape[0]):
        xc = x
        out = None
        for _ in range(att_times):
            temp = jnp.mean(xc, axis=0, keepdims=True)
            h_avg = jnp.tanh(temp @ w_stack[i]) if att_weight else temp
            att = jax.nn.sigmoid(xc @ h_avg.T)            # (N, 1)
            out = att.T @ xc                              # (1, D)
            xc = xc * att
        outs.append(out)
    return jnp.concatenate(outs, axis=1)


if __name__ == "__main__":
    # Small shapes consistent with the module: graphs of N nodes with D-dim
    # embeddings, att_num heads, att_times refinement steps.
    N1 = 24           # nodes, graph 1
    N2 = 17           # nodes, graph 2 (exercises per-graph 1/N + zero-padding)
    D = 32            # input_dim / emb_dim
    ATT_NUM = 2
    ATT_TIMES = 2
    ATT_WEIGHT = True

    key = jax.random.PRNGKey(0)
    kx, kx2, kw = jax.random.split(key, 3)
    x1 = jax.random.normal(kx, (N1, D), jnp.float32)
    x2 = jax.random.normal(kx2, (N2, D), jnp.float32)

    # Xavier-normal-ish init for W_i (glorot in the original).
    std = (2.0 / (D + D)) ** 0.5
    w_stack = std * jax.random.normal(kw, (ATT_NUM, D, D), jnp.float32)

    # Single-matrix path.
    out = attention_module_forward(
        x1, w_stack, att_times=ATT_TIMES, att_weight=ATT_WEIGHT, att_style="dot")
    out = jax.block_until_ready(out)
    ref1 = ref_forward(x1, w_stack, ATT_TIMES, ATT_WEIGHT)
    assert out.shape == (1, ATT_NUM * D), out.shape
    assert jnp.allclose(out, ref1, rtol=1e-4, atol=1e-4), float(
        jnp.max(jnp.abs(out - ref1)))

    # List-input path (Attention.forward accepts a list of matrices) — one
    # pallas_call for both graphs, different node counts.
    outs = attention_module_forward(
        [x1, x2], w_stack, att_times=ATT_TIMES, att_weight=ATT_WEIGHT,
        att_style="dot")
    outs = jax.block_until_ready(outs)
    ref2 = ref_forward(x2, w_stack, ATT_TIMES, ATT_WEIGHT)
    assert len(outs) == 2
    assert outs[0].shape == (1, ATT_NUM * D)
    assert jnp.allclose(outs[0], ref1, rtol=1e-4, atol=1e-4), float(
        jnp.max(jnp.abs(outs[0] - ref1)))
    assert jnp.allclose(outs[1], ref2, rtol=1e-4, atol=1e-4), float(
        jnp.max(jnp.abs(outs[1] - ref2)))

    print("KERNEL_OK")
</pallas_src>

<mosaic_0001>
module attributes {stable_mosaic.version = 11 : i64} {
  func.func @attention_kernel(%arg0: i32, %arg1: memref<1xf32, #tpu.memory_space<smem>>, %arg2: memref<1x24x32xf32, #tpu.memory_space<vmem>>, %arg3: memref<2x32x32xf32, #tpu.memory_space<vmem>>, %arg4: memref<1x2x32xf32, #tpu.memory_space<vmem>>) attributes {dimension_semantics = [#tpu.dimension_semantics<parallel>], iteration_bounds = array<i64: 1>, scalar_prefetch = 0 : i64, scratch_operands = 0 : i64, tpu.core_type = #tpu.core_type<tc>, window_params = [{transform_indices = @transform_0, window_bounds = array<i64: 1>}, {transform_indices = @transform_1, window_bounds = array<i64: 1, 24, 32>}, {pipeline_mode = #tpu.pipeline_mode<synchronous>, transform_indices = @transform_2, window_bounds = array<i64: 2, 32, 32>}, {transform_indices = @transform_3, window_bounds = array<i64: 1, 2, 32>}]} {
    %0 = arith.index_cast %arg0 : i32 to index
    %1 = memref.load %arg1[%0] : memref<1xf32, #tpu.memory_space<smem>>
    %c0 = arith.constant 0 : index
    %c0_0 = arith.constant 0 : index
    %c0_1 = arith.constant 0 : index
    %2 = vector.load %arg2[%c0, %c0_0, %c0_1] : memref<1x24x32xf32, #tpu.memory_space<vmem>>, vector<1x24x32xf32>
    %3 = vector.shape_cast %2 : vector<1x24x32xf32> to vector<24x32xf32>
    %c0_2 = arith.constant 0 : index
    %c0_3 = arith.constant 0 : index
    %c0_4 = arith.constant 0 : index
    %4 = vector.load %arg3[%c0_2, %c0_3, %c0_4] : memref<2x32x32xf32, #tpu.memory_space<vmem>>, vector<2x32x32xf32>
    %5 = vector.shape_cast %3 : vector<24x32xf32> to vector<1x24x32xf32>
    %6 = vector.shape_cast %5 : vector<1x24x32xf32> to vector<1x24x32xf32>
    %7 = vector.broadcast %6 : vector<1x24x32xf32> to vector<2x24x32xf32>
    %cst = arith.constant dense<0.000000e+00> : vector<32xf32>
    %8 = vector.multi_reduction <add>, %3, %cst [0] : vector<24x32xf32> to vector<32xf32>
    %9 = vector.shape_cast %8 : vector<32xf32> to vector<1x32xf32>
    %10 = vector.shape_cast %9 : vector<1x32xf32> to vector<1x1x32xf32>
    %11 = vector.shape_cast %10 : vector<1x1x32xf32> to vector<1x1x32xf32>
    %12 = vector.broadcast %11 : vector<1x1x32xf32> to vector<2x1x32xf32>
    %13 = vector.broadcast %1 : f32 to vector<2x1x32xf32>
    %14 = arith.mulf %12, %13 : vector<2x1x32xf32>
    %cst_5 = arith.constant dense<0.000000e+00> : vector<2x1x32xf32>
    %15 = tpu.matmul %14, %4, %cst_5 {dimension_numbers = #tpu.dot_dimension_numbers<[2], [1], [1], [2], [0, 0, 0, 1, 1, 2], [0], [0]>} : vector<2x1x32xf32>, vector<2x32x32xf32>, vector<2x1x32xf32> -> vector<2x1x32xf32>
    %16 = math.tanh %15 : vector<2x1x32xf32>
    %17 = vector.broadcast %16 : vector<2x1x32xf32> to vector<2x24x32xf32>
    %18 = arith.mulf %7, %17 : vector<2x24x32xf32>
    %cst_6 = arith.constant dense<0.000000e+00> : vector<2x24xf32>
    %19 = vector.multi_reduction <add>, %18, %cst_6 [2] : vector<2x24x32xf32> to vector<2x24xf32>
    %20 = vector.shape_cast %19 : vector<2x24xf32> to vector<2x24x1xf32>
    %21 = arith.negf %20 : vector<2x24x1xf32>
    %22 = math.exp %21 : vector<2x24x1xf32>
    %cst_7 = arith.constant 1.000000e+00 : f32
    %23 = vector.broadcast %cst_7 : f32 to vector<2x24x1xf32>
    %24 = arith.addf %23, %22 : vector<2x24x1xf32>
    %25 = arith.divf %23, %24 : vector<2x24x1xf32>
    %26 = vector.broadcast %25 : vector<2x24x1xf32> to vector<2x24x32xf32>
    %27 = arith.mulf %7, %26 : vector<2x24x32xf32>
    %cst_8 = arith.constant dense<0.000000e+00> : vector<2x32xf32>
    %28 = vector.multi_reduction <add>, %27, %cst_8 [1] : vector<2x24x32xf32> to vector<2x32xf32>
    %29 = vector.shape_cast %28 : vector<2x32xf32> to vector<2x1x32xf32>
    %30 = vector.broadcast %1 : f32 to vector<2x1x32xf32>
    %31 = arith.mulf %29, %30 : vector<2x1x32xf32>
    %cst_9 = arith.constant dense<0.000000e+00> : vector<2x1x32xf32>
    %32 = tpu.matmul %31, %4, %cst_9 {dimension_numbers = #tpu.dot_dimension_numbers<[2], [1], [1], [2], [0, 0, 0, 1, 1, 2], [0], [0]>} : vector<2x1x32xf32>, vector<2x32x32xf32>, vector<2x1x32xf32> -> vector<2x1x32xf32>
    %33 = math.tanh %32 : vector<2x1x32xf32>
    %34 = vector.broadcast %33 : vector<2x1x32xf32> to vector<2x24x32xf32>
    %35 = arith.mulf %27, %34 : vector<2x24x32xf32>
    %cst_10 = arith.constant dense<0.000000e+00> : vector<2x24xf32>
    %36 = vector.multi_reduction <add>, %35, %cst_10 [2] : vector<2x24x32xf32> to vector<2x24xf32>
    %37 = vector.shape_cast %36 : vector<2x24xf32> to vector<2x24x1xf32>
    %38 = arith.negf %37 : vector<2x24x1xf32>
    %39 = math.exp %38 : vector<2x24x1xf32>
    %cst_11 = arith.constant 1.000000e+00 : f32
    %40 = vector.broadcast %cst_11 : f32 to vector<2x24x1xf32>
    %41 = arith.addf %40, %39 : vector<2x24x1xf32>
    %42 = arith.divf %40, %41 : vector<2x24x1xf32>
    %43 = vector.broadcast %42 : vector<2x24x1xf32> to vector<2x24x32xf32>
    %44 = arith.mulf %27, %43 : vector<2x24x32xf32>
    %cst_12 = arith.constant dense<0.000000e+00> : vector<2x32xf32>
    %45 = vector.multi_reduction <add>, %44, %cst_12 [1] : vector<2x24x32xf32> to vector<2x32xf32>
    %46 = vector.shape_cast %45 : vector<2x32xf32> to vector<2x1x32xf32>
    %47 = vector.shape_cast %46 : vector<2x1x32xf32> to vector<2x32xf32>
    %c0_13 = arith.constant 0 : index
    %c0_14 = arith.constant 0 : index
    %c0_15 = arith.constant 0 : index
    %48 = vector.load %arg4[%c0_13, %c0_14, %c0_15] : memref<1x2x32xf32, #tpu.memory_space<vmem>>, vector<1x2x32xf32>
    %49 = vector.shape_cast %48 : vector<1x2x32xf32> to vector<2x32xf32>
    %50 = vector.shape_cast %47 : vector<2x32xf32> to vector<1x2x32xf32>
    tpu.vector_store %arg4[%c0_13, %c0_14, %c0_15], %50 {strides = array<i32>} : memref<1x2x32xf32, #tpu.memory_space<vmem>>, vector<1x2x32xf32>,
    return
  }
  func.func @transform_0(%arg0: i32) -> i32 {
    %c0_i32 = arith.constant 0 : i32
    %c0_i32_0 = arith.constant 0 : i32
    return %c0_i32 : i32
  }
  func.func @transform_1(%arg0: i32) -> (i32, i32, i32) {
    %c0_i32 = arith.constant 0 : i32
    %c0_i32_0 = arith.constant 0 : i32
    %c0_i32_1 = arith.constant 0 : i32
    return %arg0, %c0_i32, %c0_i32_0 : i32, i32, i32
  }
  func.func @transform_2(%arg0: i32) -> (i32, i32, i32) {
    %c0_i32 = arith.constant 0 : i32
    %c0_i32_0 = arith.constant 0 : i32
    %c0_i32_1 = arith.constant 0 : i32
    %c0_i32_2 = arith.constant 0 : i32
    return %c0_i32, %c0_i32_0, %c0_i32_1 : i32, i32, i32
  }
  func.func @transform_3(%arg0: i32) -> (i32, i32, i32) {
    %c0_i32 = arith.constant 0 : i32
    %c0_i32_0 = arith.constant 0 : i32
    %c0_i32_1 = arith.constant 0 : i32
    return %arg0, %c0_i32, %c0_i32_0 : i32, i32, i32
  }
}

</mosaic_0001>

<llo_original>
// kernel: tpu_custom_call.1
$region0: #{tpu_custom_call.1}
  #allocation0 [shape = 'u32[]', space=smem, size = 0x4, offset = 0x4, fixed_abs, tag = 'smem constant byte address 0x4 - core index']
  #allocation1 [shape = 'u32[144,128]{1,0:T(1,128)}', space=vmem, size = 0x12000, scoped, tag = 'internal scratch']
  #allocation2 [shape = 'f32[1]{0:T(128)S(6)}', space=smem, size = 0x200, scoped, tag = 'scoped memory for tpu_custom_call.1']
  %s0 = inlined_call_operand.<no memory space> [shape: f32[1], index: 0, kind: input, shape index: {}]
  %s1 = inlined_call_operand.hbm [shape: f32[1,24,32], index: 1, kind: input, shape index: {}]
  %s2 = inlined_call_operand.hbm [shape: f32[2,32,32], index: 2, kind: input, shape index: {}]
  %s3 = inlined_call_operand.hbm [shape: f32[1,2,32], index: 3, kind: output, shape index: {}]
  %s4 = sld [smem:[#allocation0]]
  $region30: #{tpu_custom_call.1} parent=0
    _
  %s6 = ssub.s32 1, %s4
  %s7 = scalar_select 0, %s6, %s4
  %8 = sst [smem:[#allocation2]] %s0
  $region1: #{tpu_custom_call.1} parent=0
    #allocation3 [shape = 'u8[12288]{0}', space=vmem, size = 0x3000, scoped, tag = 'input window, operand 1, single buffered']
    #allocation4 [shape = 's32[1]{0}', space=sflag, size = 0x4, scoped, tag = 'scoped memory for tpu_custom_call.1']
    #allocation5 [shape = 's32[1]{0}', space=sflag, size = 0x4, scoped, tag = 'scoped memory for tpu_custom_call.1']
    #allocation6 [shape = 'u8[32768]{0}', space=vmem, size = 0x8000, scoped, tag = 'input window, operand 2, single buffered']
    #allocation7 [shape = 's32[1]{0}', space=sflag, size = 0x4, scoped, tag = 'scoped memory for tpu_custom_call.1']
    #allocation8 [shape = 'u8[1024]{0}', space=vmem, size = 0x400, scoped, tag = 'output window, operand 0, single buffered']
    %9 = vsyncpa [#allocation4], 0
    %10 = vsyncpa [#allocation7], 0
    %11 = vsyncpa [#allocation5], 0
    // Predicated region
    $region2: #{tpu_custom_call.1} parent=1 // pred_check
      _
    $region3: #{tpu_custom_call.1} parent=1 // pred_check_branch
      %13 = sbr.rel (0) target = $region5
    $region4: #{tpu_custom_call.1} parent=1 // pred_region
      _
    $region5: #{tpu_custom_call.1} parent=1 // pred_fallthru
      _
    // Predicated region
    $region6: #{tpu_custom_call.1} parent=1 // pred_check
      _
    $region7: #{tpu_custom_call.1} parent=1 // pred_check_branch
      %15 = sbr.rel (0) target = $region9
    $region8: #{tpu_custom_call.1} parent=1 // pred_region
      %s17 = ssub.s32 384, 384
      %18 = vsyncadd [#allocation4], %s17
      %s19 = sshll.u32 [#allocation3], 4
      %s20 = int_to_ptr.vmem [resolvable:$true] %s19
      %25 = dma.hbm_to_vmem [thread:$0]  %s1, 384, %s20, [#allocation4], 128, 128, 8
    $region9: #{tpu_custom_call.1} parent=1 // pred_fallthru
      _
    // Predicated region
    $region10: #{tpu_custom_call.1} parent=1 // pred_check
      _
    $region11: #{tpu_custom_call.1} parent=1 // pred_check_branch
      %27 = sbr.rel (0) target = $region13
    $region12: #{tpu_custom_call.1} parent=1 // pred_region
      %s29 = ssub.s32 1024, 1024
      %30 = vsyncadd [#allocation7], %s29
      %s31 = sshll.u32 [#allocation6], 4
      %s32 = int_to_ptr.vmem [resolvable:$true] %s31
      %37 = dma.hbm_to_vmem [thread:$0]  %s2, 1024, %s32, [#allocation7], 128, 128, 8
    $region13: #{tpu_custom_call.1} parent=1 // pred_fallthru
      _
    // Predicated region
    $region14: #{tpu_custom_call.1} parent=1 // pred_check
      _
    $region15: #{tpu_custom_call.1} parent=1 // pred_check_branch
      %39 = sbr.rel (0) target = $region17
    $region16: #{tpu_custom_call.1} parent=1 // pred_region
      %40 = dma.done [#allocation4], 384
    $region17: #{tpu_custom_call.1} parent=1 // pred_fallthru
      _
    // Predicated region
    $region18: #{tpu_custom_call.1} parent=1 // pred_check
      _
    $region19: #{tpu_custom_call.1} parent=1 // pred_check_branch
      %42 = sbr.rel (0) target = $region21
    $region20: #{tpu_custom_call.1} parent=1 // pred_region
      %43 = dma.done [#allocation7], 1024
    $region21: #{tpu_custom_call.1} parent=1 // pred_fallthru
      _
    %s44 = sld [smem:[#allocation2]]
    %v45 = vld [vmem:[#allocation3] sm:$0xff]
    %v46 = vld [vmem:[#allocation3 + $0x8] sm:$0xff]
    %v47 = vld [vmem:[#allocation3 + $0x10] sm:$0xff]
    %v48 = vld [vmem:[#allocation6] sm:$0xff]
    %v49 = vld [vmem:[#allocation6 + $0x8] sm:$0xff]
    %v50 = vld [vmem:[#allocation6 + $0x10] sm:$0xff]
    %v51 = vld [vmem:[#allocation6 + $0x18] sm:$0xff]
    %v52 = vld [vmem:[#allocation6 + $0x20] sm:$0xff]
    %v53 = vld [vmem:[#allocation6 + $0x28] sm:$0xff]
    %v54 = vld [vmem:[#allocation6 + $0x30] sm:$0xff]
    %v55 = vld [vmem:[#allocation6 + $0x38] sm:$0xff]
    %vm56 = vcmask 261120
    %v57 = vsel %vm56, %v45, 0.0
    %v58 = vsel %vm56, %v46, 0.0
    %v59 = vadd.f32 %v57, %v58
    %v60 = vsel %vm56, %v47, 0.0
    %v61 = vadd.f32 %v59, %v60
    %v62 = vrot.slane %v61, 4
    %v63 = vadd.f32 %v61, %v62
    %v64 = vrot.slane %v63, 2
    %v65 = vadd.f32 %v63, %v64
    %v66 = vrot.slane %v65, 1
    %v67 = vadd.f32 %v65, %v66
    %v68 = vstv %s44
    %v69 = vmul.f32 %v67, %v68
    %v71 = vsel %vm56, %v69, 0
    %73 = vmatprep.subr.mxu0 0.0
    %74 = vmatpush1.msra.mxu0 %v48
    %75 = vmatprep.subr.mxu0 0.0
    %76 = vmatpush1.msra.mxu0 %v49
    %77 = vmatprep.subr.mxu0 0.0
    %78 = vmatpush1.msra.mxu0 %v50
    %79 = vmatprep.subr.mxu0 0.0
    %80 = vmatpush1.msra.mxu0 %v51
    %81 = vmatprep.subr.mxu0 0.0
    %82 = vmatpush1.msra.mxu0 0.0
    %83 = vmatprep.subr.mxu0 0.0
    %84 = vmatpush1.msra.mxu0 0.0
    %85 = vmatprep.subr.mxu0 0.0
    %86 = vmatpush1.msra.mxu0 0.0
    %87 = vmatprep.subr.mxu0 0.0
    %88 = vmatpush1.msra.mxu0 0.0
    %89 = vmatprep.subr.mxu0 0.0
    %90 = vmatpush1.msra.mxu0 0.0
    %91 = vmatprep.subr.mxu0 0.0
    %92 = vmatpush1.msra.mxu0 0.0
    %93 = vmatprep.subr.mxu0 0.0
    %94 = vmatpush1.msra.mxu0 0.0
    %95 = vmatprep.subr.mxu0 0.0
    %96 = vmatpush1.msra.mxu0 0.0
    %97 = vmatprep.subr.mxu0 0.0
    %98 = vmatpush1.msra.mxu0 0.0
    %99 = vmatprep.subr.mxu0 0.0
    %100 = vmatpush1.msra.mxu0 0.0
    %101 = vmatprep.subr.mxu0 0.0
    %102 = vmatpush1.msra.mxu0 0.0
    %103 = vmatprep.subr.mxu0 0.0
    %104 = vmatpush1.msra.mxu0 0.0
    %105 = vmatprep.subr.mxu0 0.0
    %106 = vmatpush1.msra.mxu0 0.0
    %107 = vmatprep.subr.mxu0 0.0
    %108 = vmatpush1.msra.mxu0 0.0
    %109 = vmatprep.subr.mxu0 0.0
    %110 = vmatpush1.msra.mxu0 0.0
    %111 = vmatprep.subr.mxu0 0.0
    %112 = vmatpush1.msra.mxu0 0.0
    %113 = vmatprep.subr.mxu0 0.0
    %114 = vmatpush1.msra.mxu0 0.0
    %115 = vmatprep.subr.mxu0 0.0
    %116 = vmatpush1.msra.mxu0 0.0
    %117 = vmatprep.subr.mxu0 0.0
    %118 = vmatpush1.msra.mxu0 0.0
    %119 = vmatprep.subr.mxu0 0.0
    %120 = vmatpush1.msra.mxu0 0.0
    %121 = vmatprep.subr.mxu0 0.0
    %122 = vmatpush1.msra.mxu0 0.0
    %123 = vmatprep.subr.mxu0 0.0
    %124 = vmatpush1.msra.mxu0 0.0
    %125 = vmatprep.subr.mxu0 0.0
    %126 = vmatpush1.msra.mxu0 0.0
    %127 = vmatprep.subr.mxu0 0.0
    %128 = vmatpush1.msra.mxu0 0.0
    %129 = vmatprep.subr.mxu0 0.0
    %130 = vmatpush1.msra.mxu0 0.0
    %131 = vmatprep.subr.mxu0 0.0
    %132 = vmatpush1.msra.mxu0 0.0
    %133 = vmatprep.subr.mxu0 0.0
    %134 = vmatpush1.msra.mxu0 0.0
    %135 = vmatprep.subr.mxu0 0.0
    %136 = vmatpush1.msra.mxu0 0.0
    %137 = vmatprep.mubr.f32.mxu0 0.0
    %138 = vmatmul.mubr.f32.gmra.mrb[0].mxu0 %v71
    %v139 = vpop.f32.mrb[0].mxu0
    %v140 = vadd.f32 0.0, %v139
    %v141 = vpop.f32.mrb[0].mxu0
    %142 = vdwg.mxu0
    %143 = vmatprep.subr.mxu0 0.0
    %144 = vmatpush1.msra.mxu0 %v52
    %145 = vmatprep.subr.mxu0 0.0
    %146 = vmatpush1.msra.mxu0 %v53
    %147 = vmatprep.subr.mxu0 0.0
    %148 = vmatpush1.msra.mxu0 %v54
    %149 = vmatprep.subr.mxu0 0.0
    %150 = vmatpush1.msra.mxu0 %v55
    %151 = vmatprep.subr.mxu0 0.0
    %152 = vmatpush1.msra.mxu0 0.0
    %153 = vmatprep.subr.mxu0 0.0
    %154 = vmatpush1.msra.mxu0 0.0
    %155 = vmatprep.subr.mxu0 0.0
    %156 = vmatpush1.msra.mxu0 0.0
    %157 = vmatprep.subr.mxu0 0.0
    %158 = vmatpush1.msra.mxu0 0.0
    %159 = vmatprep.subr.mxu0 0.0
    %160 = vmatpush1.msra.mxu0 0.0
    %161 = vmatprep.subr.mxu0 0.0
    %162 = vmatpush1.msra.mxu0 0.0
    %163 = vmatprep.subr.mxu0 0.0
    %164 = vmatpush1.msra.mxu0 0.0
    %165 = vmatprep.subr.mxu0 0.0
    %166 = vmatpush1.msra.mxu0 0.0
    %167 = vmatprep.subr.mxu0 0.0
    %168 = vmatpush1.msra.mxu0 0.0
    %169 = vmatprep.subr.mxu0 0.0
    %170 = vmatpush1.msra.mxu0 0.0
    %171 = vmatprep.subr.mxu0 0.0
    %172 = vmatpush1.msra.mxu0 0.0
    %173 = vmatprep.subr.mxu0 0.0
    %174 = vmatpush1.msra.mxu0 0.0
    %175 = vmatprep.subr.mxu0 0.0
    %176 = vmatpush1.msra.mxu0 0.0
    %177 = vmatprep.subr.mxu0 0.0
    %178 = vmatpush1.msra.mxu0 0.0
    %179 = vmatprep.subr.mxu0 0.0
    %180 = vmatpush1.msra.mxu0 0.0
    %181 = vmatprep.subr.mxu0 0.0
    %182 = vmatpush1.msra.mxu0 0.0
    %183 = vmatprep.subr.mxu0 0.0
    %184 = vmatpush1.msra.mxu0 0.0
    %185 = vmatprep.subr.mxu0 0.0
    %186 = vmatpush1.msra.mxu0 0.0
    %187 = vmatprep.subr.mxu0 0.0
    %188 = vmatpush1.msra.mxu0 0.0
    %189 = vmatprep.subr.mxu0 0.0
    %190 = vmatpush1.msra.mxu0 0.0
    %191 = vmatprep.subr.mxu0 0.0
    %192 = vmatpush1.msra.mxu0 0.0
    %193 = vmatprep.subr.mxu0 0.0
    %194 = vmatpush1.msra.mxu0 0.0
    %195 = vmatprep.subr.mxu0 0.0
    %196 = vmatpush1.msra.mxu0 0.0
    %197 = vmatprep.subr.mxu0 0.0
    %198 = vmatpush1.msra.mxu0 0.0
    %199 = vmatprep.subr.mxu0 0.0
    %200 = vmatpush1.msra.mxu0 0.0
    %201 = vmatprep.subr.mxu0 0.0
    %202 = vmatpush1.msra.mxu0 0.0
    %203 = vmatprep.subr.mxu0 0.0
    %204 = vmatpush1.msra.mxu0 0.0
    %205 = vmatprep.subr.mxu0 0.0
    %206 = vmatpush1.msra.mxu0 0.0
    %207 = vmatprep.mubr.f32.mxu0 0.0
    %208 = vmatmul.mubr.f32.gmra.mrb[0].mxu0 %v71
    %v209 = vpop.f32.mrb[0].mxu0
    %v210 = vadd.f32 0.0, %v209
    %v211 = vpop.f32.mrb[0].mxu0
    %212 = vdwg.mxu0
    %v213 = vtanh.pop %v140
    %v214 = vtanh.pop %v210
    %v215 = vlaneseq
    %v216 = vshrl.u32 %v215, 7
    %v217 = vsub.s32 0, %v216
    %v218 = vrot.slane %v213, %v217
    %v219 = vlaneseq
    %v220 = vshrl.u32 %v219, 7
    %v221 = vsub.s32 0, %v220
    %v222 = vrot.slane %v214, %v221
    %v223 = vmul.f32 %v45, %v218
    %v224 = vmul.f32 %v46, %v218
    %v225 = vmul.f32 %v47, %v218
    %v226 = vmul.f32 %v45, %v222
    %v227 = vmul.f32 %v46, %v222
    %v228 = vmul.f32 %v47, %v222
    %v229 = vsel %vm56, %v223, 0.0
    %230 = vadd.xlane.f32.xlu0 %v229
    %v231 = vpop.xlane.xlu0 %230
    %v232 = vsel %vm56, %v224, 0.0
    %233 = vadd.xlane.f32.xlu0 %v232
    %v234 = vpop.xlane.xlu0 %233
    %v235 = vsel %vm56, %v225, 0.0
    %236 = vadd.xlane.f32.xlu0 %v235
    %v237 = vpop.xlane.xlu0 %236
    %v238 = vsel %vm56, %v226, 0.0
    %239 = vadd.xlane.f32.xlu0 %v238
    %v240 = vpop.xlane.xlu0 %239
    %v241 = vsel %vm56, %v227, 0.0
    %242 = vadd.xlane.f32.xlu0 %v241
    %v243 = vpop.xlane.xlu0 %242
    %v244 = vsel %vm56, %v228, 0.0
    %245 = vadd.xlane.f32.xlu0 %v244
    %v246 = vpop.xlane.xlu0 %245
    %v247 = vxor.u32 %v231, 2147483648
    %v248 = vxor.u32 %v234, 2147483648
    %v249 = vxor.u32 %v237, 2147483648
    %v250 = vxor.u32 %v240, 2147483648
    %v251 = vxor.u32 %v243, 2147483648
    %v252 = vxor.u32 %v246, 2147483648
    %v253 = vmul.f32 %v247, 1.442695
    %v254 = vpow.pop %v253
    %v255 = vmul.f32 %v248, 1.442695
    %v256 = vpow.pop %v255
    %v257 = vmul.f32 %v249, 1.442695
    %v258 = vpow.pop %v257
    %v259 = vmul.f32 %v250, 1.442695
    %v260 = vpow.pop %v259
    %v261 = vmul.f32 %v251, 1.442695
    %v262 = vpow.pop %v261
    %v263 = vmul.f32 %v252, 1.442695
    %v264 = vpow.pop %v263
    %v265 = vadd.f32 %v254, 1.0
    %v266 = vadd.f32 %v256, 1.0
    %v267 = vadd.f32 %v258, 1.0
    %v268 = vadd.f32 %v260, 1.0
    %v269 = vadd.f32 %v262, 1.0
    %v270 = vadd.f32 %v264, 1.0
    %v271 = vrcp.pop %v265
    %v272 = vmul.f32 1.0, %v271
    %v273 = vrcp.pop %v266
    %v274 = vmul.f32 1.0, %v273
    %v275 = vrcp.pop %v267
    %v276 = vmul.f32 1.0, %v275
    %v277 = vrcp.pop %v268
    %v278 = vmul.f32 1.0, %v277
    %v279 = vrcp.pop %v269
    %v280 = vmul.f32 1.0, %v279
    %v281 = vrcp.pop %v270
    %v282 = vmul.f32 1.0, %v281
    %v283 = vmul.f32 %v45, %v272
    %v284 = vmul.f32 %v46, %v274
    %v285 = vmul.f32 %v47, %v276
    %v286 = vmul.f32 %v45, %v278
    %v287 = vmul.f32 %v46, %v280
    %v288 = vmul.f32 %v47, %v282
    %v289 = vsel %vm56, %v283, 0.0
    %v290 = vsel %vm56, %v284, 0.0
    %v291 = vadd.f32 %v289, %v290
    %v292 = vsel %vm56, %v285, 0.0
    %v293 = vadd.f32 %v291, %v292
    %v294 = vrot.slane %v293, 4
    %v295 = vadd.f32 %v293, %v294
    %v296 = vrot.slane %v295, 2
    %v297 = vadd.f32 %v295, %v296
    %v298 = vrot.slane %v297, 1
    %v299 = vadd.f32 %v297, %v298
    %v300 = vsel %vm56, %v286, 0.0
    %v301 = vsel %vm56, %v287, 0.0
    %v302 = vadd.f32 %v300, %v301
    %v303 = vsel %vm56, %v288, 0.0
    %v304 = vadd.f32 %v302, %v303
    %v305 = vrot.slane %v304, 4
    %v306 = vadd.f32 %v304, %v305
    %v307 = vrot.slane %v306, 2
    %v308 = vadd.f32 %v306, %v307
    %v309 = vrot.slane %v308, 1
    %v310 = vadd.f32 %v308, %v309
    %v311 = vmul.f32 %v299, %v68
    %v312 = vmul.f32 %v310, %v68
    %v314 = vsel %vm56, %v311, 0
    %316 = vmatprep.subr.mxu0 0.0
    %317 = vmatpush1.msra.mxu0 %v48
    %318 = vmatprep.subr.mxu0 0.0
    %319 = vmatpush1.msra.mxu0 %v49
    %320 = vmatprep.subr.mxu0 0.0
    %321 = vmatpush1.msra.mxu0 %v50
    %322 = vmatprep.subr.mxu0 0.0
    %323 = vmatpush1.msra.mxu0 %v51
    %324 = vmatprep.subr.mxu0 0.0
    %325 = vmatpush1.msra.mxu0 0.0
    %326 = vmatprep.subr.mxu0 0.0
    %327 = vmatpush1.msra.mxu0 0.0
    %328 = vmatprep.subr.mxu0 0.0
    %329 = vmatpush1.msra.mxu0 0.0
    %330 = vmatprep.subr.mxu0 0.0
    %331 = vmatpush1.msra.mxu0 0.0
    %332 = vmatprep.subr.mxu0 0.0
    %333 = vmatpush1.msra.mxu0 0.0
    %334 = vmatprep.subr.mxu0 0.0
    %335 = vmatpush1.msra.mxu0 0.0
    %336 = vmatprep.subr.mxu0 0.0
    %337 = vmatpush1.msra.mxu0 0.0
    %338 = vmatprep.subr.mxu0 0.0
    %339 = vmatpush1.msra.mxu0 0.0
    %340 = vmatprep.subr.mxu0 0.0
    %341 = vmatpush1.msra.mxu0 0.0
    %342 = vmatprep.subr.mxu0 0.0
    %343 = vmatpush1.msra.mxu0 0.0
    %344 = vmatprep.subr.mxu0 0.0
    %345 = vmatpush1.msra.mxu0 0.0
    %346 = vmatprep.subr.mxu0 0.0
    %347 = vmatpush1.msra.mxu0 0.0
    %348 = vmatprep.subr.mxu0 0.0
    %349 = vmatpush1.msra.mxu0 0.0
    %350 = vmatprep.subr.mxu0 0.0
    %351 = vmatpush1.msra.mxu0 0.0
    %352 = vmatprep.subr.mxu0 0.0
    %353 = vmatpush1.msra.mxu0 0.0
    %354 = vmatprep.subr.mxu0 0.0
    %355 = vmatpush1.msra.mxu0 0.0
    %356 = vmatprep.subr.mxu0 0.0
    %357 = vmatpush1.msra.mxu0 0.0
    %358 = vmatprep.subr.mxu0 0.0
    %359 = vmatpush1.msra.mxu0 0.0
    %360 = vmatprep.subr.mxu0 0.0
    %361 = vmatpush1.msra.mxu0 0.0
    %362 = vmatprep.subr.mxu0 0.0
    %363 = vmatpush1.msra.mxu0 0.0
    %364 = vmatprep.subr.mxu0 0.0
    %365 = vmatpush1.msra.mxu0 0.0
    %366 = vmatprep.subr.mxu0 0.0
    %367 = vmatpush1.msra.mxu0 0.0
    %368 = vmatprep.subr.mxu0 0.0
    %369 = vmatpush1.msra.mxu0 0.0
    %370 = vmatprep.subr.mxu0 0.0
    %371 = vmatpush1.msra.mxu0 0.0
    %372 = vmatprep.subr.mxu0 0.0
    %373 = vmatpush1.msra.mxu0 0.0
    %374 = vmatprep.subr.mxu0 0.0
    %375 = vmatpush1.msra.mxu0 0.0
    %376 = vmatprep.subr.mxu0 0.0
    %377 = vmatpush1.msra.mxu0 0.0
    %378 = vmatprep.subr.mxu0 0.0
    %379 = vmatpush1.msra.mxu0 0.0
    %380 = vmatprep.mubr.f32.mxu0 0.0
    %381 = vmatmul.mubr.f32.gmra.mrb[0].mxu0 %v314
    %v382 = vpop.f32.mrb[0].mxu0
    %v383 = vadd.f32 0.0, %v382
    %v384 = vpop.f32.mrb[0].mxu0
    %385 = vdwg.mxu0
    %v387 = vsel %vm56, %v312, 0
    %389 = vmatprep.subr.mxu0 0.0
    %390 = vmatpush1.msra.mxu0 %v52
    %391 = vmatprep.subr.mxu0 0.0
    %392 = vmatpush1.msra.mxu0 %v53
    %393 = vmatprep.subr.mxu0 0.0
    %394 = vmatpush1.msra.mxu0 %v54
    %395 = vmatprep.subr.mxu0 0.0
    %396 = vmatpush1.msra.mxu0 %v55
    %397 = vmatprep.subr.mxu0 0.0
    %398 = vmatpush1.msra.mxu0 0.0
    %399 = vmatprep.subr.mxu0 0.0
    %400 = vmatpush1.msra.mxu0 0.0
    %401 = vmatprep.subr.mxu0 0.0
    %402 = vmatpush1.msra.mxu0 0.0
    %403 = vmatprep.subr.mxu0 0.0
    %404 = vmatpush1.msra.mxu0 0.0
    %405 = vmatprep.subr.mxu0 0.0
    %406 = vmatpush1.msra.mxu0 0.0
    %407 = vmatprep.subr.mxu0 0.0
    %408 = vmatpush1.msra.mxu0 0.0
    %409 = vmatprep.subr.mxu0 0.0
    %410 = vmatpush1.msra.mxu0 0.0
    %411 = vmatprep.subr.mxu0 0.0
    %412 = vmatpush1.msra.mxu0 0.0
    %413 = vmatprep.subr.mxu0 0.0
    %414 = vmatpush1.msra.mxu0 0.0
    %415 = vmatprep.subr.mxu0 0.0
    %416 = vmatpush1.msra.mxu0 0.0
    %417 = vmatprep.subr.mxu0 0.0
    %418 = vmatpush1.msra.mxu0 0.0
    %419 = vmatprep.subr.mxu0 0.0
    %420 = vmatpush1.msra.mxu0 0.0
    %421 = vmatprep.subr.mxu0 0.0
    %422 = vmatpush1.msra.mxu0 0.0
    %423 = vmatprep.subr.mxu0 0.0
    %424 = vmatpush1.msra.mxu0 0.0
    %425 = vmatprep.subr.mxu0 0.0
    %426 = vmatpush1.msra.mxu0 0.0
    %427 = vmatprep.subr.mxu0 0.0
    %428 = vmatpush1.msra.mxu0 0.0
    %429 = vmatprep.subr.mxu0 0.0
    %430 = vmatpush1.msra.mxu0 0.0
    %431 = vmatprep.subr.mxu0 0.0
    %432 = vmatpush1.msra.mxu0 0.0
    %433 = vmatprep.subr.mxu0 0.0
    %434 = vmatpush1.msra.mxu0 0.0
    %435 = vmatprep.subr.mxu0 0.0
    %436 = vmatpush1.msra.mxu0 0.0
    %437 = vmatprep.subr.mxu0 0.0
    %438 = vmatpush1.msra.mxu0 0.0
    %439 = vmatprep.subr.mxu0 0.0
    %440 = vmatpush1.msra.mxu0 0.0
    %441 = vmatprep.subr.mxu0 0.0
    %442 = vmatpush1.msra.mxu0 0.0
    %443 = vmatprep.subr.mxu0 0.0
    %444 = vmatpush1.msra.mxu0 0.0
    %445 = vmatprep.subr.mxu0 0.0
    %446 = vmatpush1.msra.mxu0 0.0
    %447 = vmatprep.subr.mxu0 0.0
    %448 = vmatpush1.msra.mxu0 0.0
    %449 = vmatprep.subr.mxu0 0.0
    %450 = vmatpush1.msra.mxu0 0.0
    %451 = vmatprep.subr.mxu0 0.0
    %452 = vmatpush1.msra.mxu0 0.0
    %453 = vmatprep.mubr.f32.mxu0 0.0
    %454 = vmatmul.mubr.f32.gmra.mrb[0].mxu0 %v387
    %v455 = vpop.f32.mrb[0].mxu0
    %v456 = vadd.f32 0.0, %v455
    %v457 = vpop.f32.mrb[0].mxu0
    %458 = vdwg.mxu0
    %v459 = vtanh.pop %v383
    %v460 = vtanh.pop %v456
    %v461 = vlaneseq
    %v462 = vshrl.u32 %v461, 7
    %v463 = vsub.s32 0, %v462
    %v464 = vrot.slane %v459, %v463
    %v465 = vlaneseq
    %v466 = vshrl.u32 %v465, 7
    %v467 = vsub.s32 0, %v466
    %v468 = vrot.slane %v460, %v467
    %v469 = vmul.f32 %v283, %v464
    %v470 = vmul.f32 %v284, %v464
    %v471 = vmul.f32 %v285, %v464
    %v472 = vmul.f32 %v286, %v468
    %v473 = vmul.f32 %v287, %v468
    %v474 = vmul.f32 %v288, %v468
    %v475 = vsel %vm56, %v469, 0.0
    %476 = vadd.xlane.f32.xlu0 %v475
    %v477 = vpop.xlane.xlu0 %476
    %v478 = vsel %vm56, %v470, 0.0
    %479 = vadd.xlane.f32.xlu0 %v478
    %v480 = vpop.xlane.xlu0 %479
    %v481 = vsel %vm56, %v471, 0.0
    %482 = vadd.xlane.f32.xlu0 %v481
    %v483 = vpop.xlane.xlu0 %482
    %v484 = vsel %vm56, %v472, 0.0
    %485 = vadd.xlane.f32.xlu0 %v484
    %v486 = vpop.xlane.xlu0 %485
    %v487 = vsel %vm56, %v473, 0.0
    %488 = vadd.xlane.f32.xlu0 %v487
    %v489 = vpop.xlane.xlu0 %488
    %v490 = vsel %vm56, %v474, 0.0
    %491 = vadd.xlane.f32.xlu0 %v490
    %v492 = vpop.xlane.xlu0 %491
    %v493 = vxor.u32 %v477, 2147483648
    %v494 = vxor.u32 %v480, 2147483648
    %v495 = vxor.u32 %v483, 2147483648
    %v496 = vxor.u32 %v486, 2147483648
    %v497 = vxor.u32 %v489, 2147483648
    %v498 = vxor.u32 %v492, 2147483648
    %v499 = vmul.f32 %v493, 1.442695
    %v500 = vpow.pop %v499
    %v501 = vmul.f32 %v494, 1.442695
    %v502 = vpow.pop %v501
    %v503 = vmul.f32 %v495, 1.442695
    %v504 = vpow.pop %v503
    %v505 = vmul.f32 %v496, 1.442695
    %v506 = vpow.pop %v505
    %v507 = vmul.f32 %v497, 1.442695
    %v508 = vpow.pop %v507
    %v509 = vmul.f32 %v498, 1.442695
    %v510 = vpow.pop %v509
    %v511 = vadd.f32 %v500, 1.0
    %v512 = vadd.f32 %v502, 1.0
    %v513 = vadd.f32 %v504, 1.0
    %v514 = vadd.f32 %v506, 1.0
    %v515 = vadd.f32 %v508, 1.0
    %v516 = vadd.f32 %v510, 1.0
    %v517 = vrcp.pop %v511
    %v518 = vmul.f32 1.0, %v517
    %v519 = vrcp.pop %v512
    %v520 = vmul.f32 1.0, %v519
    %v521 = vrcp.pop %v513
    %v522 = vmul.f32 1.0, %v521
    %v523 = vrcp.pop %v514
    %v524 = vmul.f32 1.0, %v523
    %v525 = vrcp.pop %v515
    %v526 = vmul.f32 1.0, %v525
    %v527 = vrcp.pop %v516
    %v528 = vmul.f32 1.0, %v527
    %v529 = vmul.f32 %v283, %v518
    %v530 = vmul.f32 %v284, %v520
    %v531 = vmul.f32 %v285, %v522
    %v532 = vmul.f32 %v286, %v524
    %v533 = vmul.f32 %v287, %v526
    %v534 = vmul.f32 %v288, %v528
    %v535 = vsel %vm56, %v529, 0.0
    %v536 = vsel %vm56, %v530, 0.0
    %v537 = vadd.f32 %v535, %v536
    %v538 = vsel %vm56, %v531, 0.0
    %v539 = vadd.f32 %v537, %v538
    %v540 = vrot.slane %v539, 4
    %v541 = vadd.f32 %v539, %v540
    %v542 = vrot.slane %v541, 2
    %v543 = vadd.f32 %v541, %v542
    %v544 = vrot.slane %v543, 1
    %v545 = vadd.f32 %v543, %v544
    %v546 = vsel %vm56, %v532, 0.0
    %v547 = vsel %vm56, %v533, 0.0
    %v548 = vadd.f32 %v546, %v547
    %v549 = vsel %vm56, %v534, 0.0
    %v550 = vadd.f32 %v548, %v549
    %v551 = vrot.slane %v550, 4
    %v552 = vadd.f32 %v550, %v551
    %v553 = vrot.slane %v552, 2
    %v554 = vadd.f32 %v552, %v553
    %v555 = vrot.slane %v554, 1
    %v556 = vadd.f32 %v554, %v555
    %vm559 = vcmask 1041409
    %v560 = vsel %vm559, %v556, %v545
    %vm562 = vcmask 254976
    %563 = vst.msk [vmem:[#allocation8] sm:$0x3] %vm562, %v560
    // Predicated region
    $region22: #{tpu_custom_call.1} parent=1 // pred_check
      _
    $region23: #{tpu_custom_call.1} parent=1 // pred_check_branch
      %565 = sbr.rel (0) target = $region25
    $region24: #{tpu_custom_call.1} parent=1 // pred_region
      %s567 = ssub.s32 32, 32
      %568 = vsyncadd [#allocation5], %s567
      %s570 = sshll.u32 [#allocation8], 4
      %s571 = int_to_ptr.vmem [resolvable:$true] %s570
      %573 = dma.vmem_to_hbm [thread:$0]  %s571, 32, %s3, [#allocation5]
    $region25: #{tpu_custom_call.1} parent=1 // pred_fallthru
      _
    // Predicated region
    $region26: #{tpu_custom_call.1} parent=1 // pred_check
      _
    $region27: #{tpu_custom_call.1} parent=1 // pred_check_branch
      %575 = sbr.rel (0) target = $region29
    $region28: #{tpu_custom_call.1} parent=1 // pred_region
      %576 = dma.done [#allocation5], 32
    $region29: #{tpu_custom_call.1} parent=1 // pred_fallthru
      _
    %577 = vsyncpa [#allocation4], 1
    %578 = vsyncpa [#allocation7], 1
    %579 = vsyncpa [#allocation5], 1

</llo_original>
